<compile_context>
chip_gen: v5e
topology: v5e:2x2
jax: 0.10.0
libtpu: 0.0.40
codegen_flags: <defaults>
</compile_context>

<pallas_src>
import functools

import jax
import jax.numpy as jnp
from jax.experimental import pallas as pl
from jax.experimental.pallas import tpu as pltpu


def _cdiv(a, b):
    return -(-a // b)


def _round_up(x, m):
    return _cdiv(x, m) * m


def _vmem_capacity_bytes():
    """Physical VMEM of the local TPU, with a conservative (v7x) fallback."""
    try:
        return int(pltpu.get_tpu_info().vmem_capacity_bytes)
    except Exception:
        return 64 * 1024 * 1024


def _pick_tiles(R, itemsize, max_block_rows, num_splits, tile_budget_bytes):
    """Choose (ts, nbps, R_pad): lane-dense row-tile size, blocks per split,
    padded row count.  ts is a multiple of 128 so S tiles load unmasked; R_pad
    is kept as small as the (num_splits, ts) granularity allows so we never
    stream more padded-zero bytes than necessary."""
    row_cap = max(128, (int(max_block_rows) // 128) * 128)
    share_cap = _round_up(_cdiv(R, num_splits), 128)   # one split's share of rows
    cap = min(row_cap, share_cap)

    ts = 128
    for cand in (1024, 512, 256, 128):
        if cand > cap:
            continue
        nb = _cdiv(R, cand)
        nbps = _cdiv(nb, num_splits)
        r_pad = num_splits * nbps * cand
        if 2 * cand * r_pad * itemsize <= tile_budget_bytes:
            ts = cand
            break
    nb = _cdiv(R, ts)
    nbps = _cdiv(nb, num_splits)
    R_pad = num_splits * nbps * ts
    return ts, nbps, R_pad


def _quadform_kernel(x_ref, s_ref, out_ref, acc_ref, *, ts):
    """One row block of   sum((S @ X) * X)   accumulated into a (ts, D) scratch.

    Grid: (num_splits, blocks_per_split).  The reduction axis is innermost
    ("arbitrary"); each split owns a private (8, 128) output tile."""
    split = pl.program_id(0)
    blk = pl.program_id(1)
    nbps = pl.num_programs(1)

    @pl.when(blk == 0)
    def _init():
        acc_ref[...] = jnp.zeros_like(acc_ref)

    # (ts, D) = (this row block of S) @ (full X); f32 accumulation on the MXU.
    sx = jnp.dot(s_ref[...], x_ref[...], preferred_element_type=jnp.float32)

    # Matching X rows come from the resident copy (no second HBM stream of X).
    row0 = pl.multiple_of((split * nbps + blk) * ts, ts)
    x_blk = x_ref[pl.ds(row0, ts), :].astype(jnp.float32)

    # Elementwise accumulate (pure VPU); reduce to a scalar only in finalize.
    acc_ref[...] += sx * x_blk

    @pl.when(blk == nbps - 1)
    def _finalize():
        out_ref[...] = jnp.broadcast_to(
            jnp.sum(acc_ref[...], keepdims=True), out_ref.shape)


class KPMFLoss:
    """Pallas-TPU KPMFLoss mirroring the PyTorch module (__init__ / forward / parts).

    All fixed, expensive work (matrix inverse, padding S to lane-dense tiles,
    optional bf16 cast, tile planning) happens once here; forward() only pads
    the small (R, D) factor matrices.
    """

    def __init__(self, lambdas, K_U, K_V, *, param_dtype=None,
                 max_block_rows=1024, num_splits=1, core_parallel=False):
        self.lambdas = tuple(float(x) for x in lambdas)
        self.num_splits = int(num_splits)
        self.dtype = jnp.dtype(param_dtype) if param_dtype is not None else jnp.dtype(jnp.float32)

        # VMEM plan adapted to the part (v5e/v6e: 128 MiB, v7x: 64 MiB physical).
        vmem_cap = _vmem_capacity_bytes()
        if vmem_cap >= 100 * (1 << 20):
            self._tile_budget = 40 * (1 << 20)
            self._vmem_limit_cap = 96 * (1 << 20)
        else:
            self._tile_budget = 10 * (1 << 20)
            self._vmem_limit_cap = 44 * (1 << 20)

        # On v7x, num_splits=2 + core_parallel=True gives each TensorCore one
        # half of the S stream.  On single-core v5e/v6e keep num_splits=1.
        if core_parallel and self.num_splits > 1:
            self._dim_sem = (pltpu.CORE_PARALLEL, pltpu.ARBITRARY)
        else:
            self._dim_sem = ("parallel", "arbitrary")

        # __init__-time setup glue (matches K.inverse() in the PyTorch module).
        self.K_U, self.K_V = K_U, K_V
        self.S_U = jnp.linalg.inv(K_U.astype(jnp.float32))
        self.S_V = jnp.linalg.inv(K_V.astype(jnp.float32))

        self._u_plan = self._prepare(self.S_U, max_block_rows)
        self._v_plan = self._prepare(self.S_V, max_block_rows)

    # ---------------------------------------------------------------- setup --
    def _prepare(self, S, max_block_rows):
        R = S.shape[0]
        ts, nbps, R_pad = _pick_tiles(R, self.dtype.itemsize, max_block_rows,
                                      self.num_splits, self._tile_budget)
        # Pad + cast ONCE.  Padded rows/cols are zero, so they contribute
        # exactly 0 to the quadratic form.
        S_pad = jnp.pad(S, ((0, R_pad - R), (0, R_pad - R))).astype(self.dtype)
        return dict(S_pad=S_pad, ts=ts, nbps=nbps, R_pad=R_pad)

    # -------------------------------------------------------------- forward --
    def parts(self, preds, targets, U, V):
        n = preds.shape[0]
        # Squared error is O(n): keep it in plain XLA so it doesn't steal VMEM
        # or DMA streams from the HBM-bound quadratic-form kernel.
        d = preds.astype(jnp.float32) - targets.astype(jnp.float32)
        se = jnp.sum(d * d) / n * self.lambdas[0]
        u_loss = self._quadform(U, self._u_plan) * self.lambdas[1]
        v_loss = self._quadform(V, self._v_plan) * self.lambdas[2]
        return se, u_loss, v_loss

    def forward(self, preds, targets, U, V):
        se, u_loss, v_loss = self.parts(preds, targets, U, V)
        return se + u_loss + v_loss

    __call__ = forward

    # --------------------------------------------------------------- kernel --
    def _quadform(self, X, plan):
        """sum((S @ X) * X) == sum(((X.T @ S).T) * X), streamed over S rows."""
        S_pad = plan["S_pad"]
        ts, nbps, R_pad = plan["ts"], plan["nbps"], plan["R_pad"]
        ns = self.num_splits
        R, D = X.shape
        itemsize = self.dtype.itemsize

        # Per-call padding touches only the small (R_pad, D) factor matrix;
        # padded rows are zero and contribute nothing.
        X_pad = jnp.pad(X.astype(self.dtype), ((0, R_pad - R), (0, 0)))

        vmem_needed = (2 * ts * R_pad * itemsize        # S row tiles (double-buffered)
                       + 2 * R_pad * D * itemsize       # resident X (also double-buffered)
                       + 2 * ns * 8 * 128 * 4           # output tiles
                       + ts * D * 4                     # f32 accumulator scratch
                       + (1 << 20))                     # compiler-internal headroom
        vmem_limit = int(min(max(vmem_needed, 32 * (1 << 20)), self._vmem_limit_cap))

        cost = pl.CostEstimate(
            flops=2 * R_pad * R_pad * D + 2 * R_pad * D,
            transcendentals=0,
            bytes_accessed=itemsize * (R_pad * R_pad + R_pad * D) + 4 * ns * 8 * 128,
        )

        out = pl.pallas_call(
            functools.partial(_quadform_kernel, ts=ts),
            out_shape=jax.ShapeDtypeStruct((ns * 8, 128), jnp.float32),
            grid_spec=pltpu.PrefetchScalarGridSpec(
                num_scalar_prefetch=0,
                grid=(ns, nbps),
                in_specs=[
                    # X resident (constant index_map).
                    pl.BlockSpec((R_pad, D), lambda s, b: (0, 0)),
                    # Lane-dense S row tile: (ts, R_pad), ts and R_pad are
                    # multiples of 128 -> unmasked loads, full-width DMA.
                    pl.BlockSpec((ts, R_pad), lambda s, b: (s * nbps + b, 0)),
                ],
                out_specs=pl.BlockSpec((8, 128), lambda s, b: (s, 0)),
                scratch_shapes=[pltpu.VMEM((ts, D), jnp.float32)],
            ),
            compiler_params=pltpu.CompilerParams(
                dimension_semantics=self._dim_sem,
                vmem_limit_bytes=vmem_limit,
            ),
            cost_estimate=cost,
        )(X_pad, S_pad)

        # Each split's (8, 128) tile is filled with its scalar partial.
        return out.reshape(ns, 8, 128)[:, 0, 0].sum()


# ------------------------------------------------------------------ reference --
def kpmf_loss_parts_ref(preds, targets, U, V, S_U, S_V, lambdas):
    """Plain-JAX reference mirroring the PyTorch code exactly (f32, highest prec)."""
    n = preds.shape[0]
    hp = jax.lax.Precision.HIGHEST
    se = jnp.sum((preds - targets) ** 2) / n * lambdas[0]
    u = jnp.sum(jnp.matmul(U.T, S_U, precision=hp).T * U) * lambdas[1]
    v = jnp.sum(jnp.matmul(V.T, S_V, precision=hp).T * V) * lambdas[2]
    return se, u, v


def kpmf_loss_ref(preds, targets, U, V, S_U, S_V, lambdas):
    se, u, v = kpmf_loss_parts_ref(preds, targets, U, V, S_U, S_V, lambdas)
    return se + u + v


def _make_case(key, N, M, D, n):
    k_p, k_t, k_u, k_v, k_ku, k_kv = jax.random.split(key, 6)
    # PSD kernel matrices (the module's K_U / K_V "parameters").
    A_u = jax.random.normal(k_ku, (N, N), dtype=jnp.float32)
    K_U = A_u @ A_u.T + N * jnp.eye(N, dtype=jnp.float32)
    A_v = jax.random.normal(k_kv, (M, M), dtype=jnp.float32)
    K_V = A_v @ A_v.T + M * jnp.eye(M, dtype=jnp.float32)
    preds = jax.random.normal(k_p, (n,), dtype=jnp.float32)
    targets = jax.random.normal(k_t, (n,), dtype=jnp.float32)
    U = 0.1 * jax.random.normal(k_u, (N, D), dtype=jnp.float32)
    V = 0.1 * jax.random.normal(k_v, (M, D), dtype=jnp.float32)
    return preds, targets, U, V, K_U, K_V


def _check_parts(got, want, rtol, atol):
    for g, w in zip(got, want):
        assert jnp.allclose(g, w, rtol=rtol, atol=atol), (got, want)


if __name__ == "__main__":
    lambdas = (0.7, 0.01, 0.02)
    root = jax.random.PRNGKey(0)
    key_small, key_med = jax.random.split(root, 2)

    # --- small case (original test shapes): single row block ----------------
    preds, targets, U, V, K_U, K_V = _make_case(key_small, N=16, M=24, D=8, n=32)
    loss_mod = KPMFLoss(lambdas, K_U, K_V)
    parts = loss_mod.parts(preds, targets, U, V)
    loss = loss_mod(preds, targets, U, V)
    jax.block_until_ready(loss)
    parts_ref = kpmf_loss_parts_ref(preds, targets, U, V,
                                    loss_mod.S_U, loss_mod.S_V, lambdas)
    _check_parts(parts, parts_ref, rtol=2e-3, atol=1e-6)
    assert jnp.allclose(loss, sum(parts_ref), rtol=2e-3, atol=1e-6), (loss, sum(parts_ref))

    # --- medium case: multi-block streaming of S -----------------------------
    preds, targets, U, V, K_U, K_V = _make_case(key_med, N=200, M=136, D=16, n=300)
    loss_mod = KPMFLoss(lambdas, K_U, K_V, max_block_rows=128)
    parts = loss_mod.parts(preds, targets, U, V)
    jax.block_until_ready(parts[1])
    parts_ref = kpmf_loss_parts_ref(preds, targets, U, V,
                                    loss_mod.S_U, loss_mod.S_V, lambdas)
    _check_parts(parts, parts_ref, rtol=2e-3, atol=1e-6)

    # --- 2-way split path (the layout used with core_parallel=True on v7x) ---
    loss_mod2 = KPMFLoss(lambdas, K_U, K_V, max_block_rows=128, num_splits=2)
    parts2 = loss_mod2.parts(preds, targets, U, V)
    jax.block_until_ready(parts2[1])
    _check_parts(parts2, parts_ref, rtol=2e-3, atol=1e-6)

    # --- bf16 streaming path: halves HBM bytes, f32 accumulation -------------
    loss_bf16 = KPMFLoss(lambdas, K_U, K_V, param_dtype=jnp.bfloat16,
                         max_block_rows=128)
    parts_b = loss_bf16.parts(preds, targets, U, V)
    jax.block_until_ready(parts_b[1])
    Sb_U = loss_bf16.S_U.astype(jnp.bfloat16).astype(jnp.float32)
    Sb_V = loss_bf16.S_V.astype(jnp.bfloat16).astype(jnp.float32)
    Ub = U.astype(jnp.bfloat16).astype(jnp.float32)
    Vb = V.astype(jnp.bfloat16).astype(jnp.float32)
    parts_b_ref = kpmf_loss_parts_ref(preds, targets, Ub, Vb, Sb_U, Sb_V, lambdas)
    _check_parts(parts_b, parts_b_ref, rtol=1e-2, atol=1e-6)

    print("KERNEL_OK")
</pallas_src>

<mosaic_0001>
module attributes {stable_mosaic.version = 11 : i64} {
  func.func @_quadform_kernel(%arg0: i32, %arg1: i32, %arg2: memref<128x8xf32, #tpu.memory_space<vmem>>, %arg3: memref<128x128xf32, #tpu.memory_space<vmem>>, %arg4: memref<8x128xf32, #tpu.memory_space<vmem>>, %arg5: memref<128x8xf32, #tpu.memory_space<vmem>>) attributes {dimension_semantics = [#tpu.dimension_semantics<parallel>, #tpu.dimension_semantics<arbitrary>], iteration_bounds = array<i64: 1, 1>, scalar_prefetch = 0 : i64, scratch_operands = 1 : i64, tpu.core_type = #tpu.core_type<tc>, window_params = [{pipeline_mode = #tpu.pipeline_mode<synchronous>, transform_indices = @transform_0, window_bounds = array<i64: 128, 8>}, {transform_indices = @transform_1, window_bounds = array<i64: 128, 128>}, {transform_indices = @transform_2, window_bounds = array<i64: 8, 128>}]} {
    %c0_i32 = arith.constant 0 : i32
    %0 = arith.cmpi eq, %arg1, %c0_i32 : i32
    %1 = arith.extui %0 : i1 to i32
    %c0_i32_0 = arith.constant 0 : i32
    %2 = arith.cmpi ne, %1, %c0_i32_0 : i32
    scf.if %2 {
      %cst_11 = arith.constant 0.000000e+00 : f32
      %19 = vector.broadcast %cst_11 : f32 to vector<128x8xf32>
      %c0_12 = arith.constant 0 : index
      %c0_13 = arith.constant 0 : index
      %20 = vector.load %arg5[%c0_12, %c0_13] : memref<128x8xf32, #tpu.memory_space<vmem>>, vector<128x8xf32>
      tpu.vector_store %arg5[%c0_12, %c0_13], %19 {strides = array<i32>} : memref<128x8xf32, #tpu.memory_space<vmem>>, vector<128x8xf32>,
    } else {
    }
    %c0 = arith.constant 0 : index
    %c0_1 = arith.constant 0 : index
    %3 = vector.load %arg3[%c0, %c0_1] : memref<128x128xf32, #tpu.memory_space<vmem>>, vector<128x128xf32>
    %c0_2 = arith.constant 0 : index
    %c0_3 = arith.constant 0 : index
    %4 = vector.load %arg2[%c0_2, %c0_3] : memref<128x8xf32, #tpu.memory_space<vmem>>, vector<128x8xf32>
    %cst = arith.constant dense<0.000000e+00> : vector<128x8xf32>
    %5 = tpu.matmul %3, %4, %cst {dimension_numbers = #tpu.dot_dimension_numbers<[1], [0], [0], [1], [0, 0, 1, 1], [], []>} : vector<128x128xf32>, vector<128x8xf32>, vector<128x8xf32> -> vector<128x8xf32>
    %c1_i32 = arith.constant 1 : i32
    %6 = arith.muli %arg0, %c1_i32 : i32
    %7 = arith.addi %6, %arg1 : i32
    %c128_i32 = arith.constant 128 : i32
    %8 = arith.muli %7, %c128_i32 : i32
    %9 = tpu.assume_multiple %8, 128 : i32
    %10 = arith.index_cast %9 : i32 to index
    %c0_4 = arith.constant 0 : index
    %11 = vector.load %arg2[%10, %c0_4] : memref<128x8xf32, #tpu.memory_space<vmem>>, vector<128x8xf32>
    %c0_5 = arith.constant 0 : index
    %c0_6 = arith.constant 0 : index
    %12 = vector.load %arg5[%c0_5, %c0_6] : memref<128x8xf32, #tpu.memory_space<vmem>>, vector<128x8xf32>
    %13 = arith.mulf %5, %11 : vector<128x8xf32>
    %14 = arith.addf %12, %13 : vector<128x8xf32>
    %c0_7 = arith.constant 0 : index
    %c0_8 = arith.constant 0 : index
    %15 = vector.load %arg5[%c0_7, %c0_8] : memref<128x8xf32, #tpu.memory_space<vmem>>, vector<128x8xf32>
    tpu.vector_store %arg5[%c0_7, %c0_8], %14 {strides = array<i32>} : memref<128x8xf32, #tpu.memory_space<vmem>>, vector<128x8xf32>,
    %c0_i32_9 = arith.constant 0 : i32
    %16 = arith.cmpi eq, %arg1, %c0_i32_9 : i32
    %17 = arith.extui %16 : i1 to i32
    %c0_i32_10 = arith.constant 0 : i32
    %18 = arith.cmpi ne, %17, %c0_i32_10 : i32
    scf.if %18 {
      %c0_11 = arith.constant 0 : index
      %c0_12 = arith.constant 0 : index
      %19 = vector.load %arg5[%c0_11, %c0_12] : memref<128x8xf32, #tpu.memory_space<vmem>>, vector<128x8xf32>
      %20 = vector.shape_cast %19 : vector<128x8xf32> to vector<1x128x8xf32>
      %cst_13 = arith.constant dense<0.000000e+00> : vector<1xf32>
      %21 = vector.multi_reduction <add>, %20, %cst_13 [1, 2] : vector<1x128x8xf32> to vector<1xf32>
      %22 = vector.shape_cast %21 : vector<1xf32> to vector<1x1x1xf32>
      %23 = vector.extract %22[0, 0, 0] : f32 from vector<1x1x1xf32>
      %24 = vector.broadcast %23 : f32 to vector<1x1xf32>
      %25 = vector.shape_cast %24 : vector<1x1xf32> to vector<1x1xf32>
      %26 = vector.broadcast %25 : vector<1x1xf32> to vector<8x128xf32>
      %c0_14 = arith.constant 0 : index
      %c0_15 = arith.constant 0 : index
      %27 = vector.load %arg4[%c0_14, %c0_15] : memref<8x128xf32, #tpu.memory_space<vmem>>, vector<8x128xf32>
      tpu.vector_store %arg4[%c0_14, %c0_15], %26 {strides = array<i32>} : memref<8x128xf32, #tpu.memory_space<vmem>>, vector<8x128xf32>,
    } else {
    }
    return
  }
  func.func @transform_0(%arg0: i32, %arg1: i32) -> (i32, i32) {
    %c0_i32 = arith.constant 0 : i32
    %c0_i32_0 = arith.constant 0 : i32
    %c0_i32_1 = arith.constant 0 : i32
    return %c0_i32, %c0_i32_0 : i32, i32
  }
  func.func @transform_1(%arg0: i32, %arg1: i32) -> (i32, i32) {
    %c1_i32 = arith.constant 1 : i32
    %0 = arith.muli %arg0, %c1_i32 : i32
    %1 = arith.addi %0, %arg1 : i32
    %c0_i32 = arith.constant 0 : i32
    %c0_i32_0 = arith.constant 0 : i32
    return %1, %c0_i32 : i32, i32
  }
  func.func @transform_2(%arg0: i32, %arg1: i32) -> (i32, i32) {
    %c0_i32 = arith.constant 0 : i32
    %c0_i32_0 = arith.constant 0 : i32
    return %arg0, %c0_i32 : i32, i32
  }
}

</mosaic_0001>

<llo_original>
// kernel: tpu_custom_call.1
$region0: #{tpu_custom_call.1}
  #allocation0 [shape = 'u32[]', space=smem, size = 0x4, offset = 0x4, fixed_abs, tag = 'smem constant byte address 0x4 - core index']
  #allocation1 [shape = 'u32[72,128]{1,0:T(1,128)}', space=vmem, size = 0x9000, scoped, tag = 'internal scratch']
  #allocation2 [shape = 'f32[128,8]{1,0:T(8,128)}', space=vmem, size = 0x10000, scoped, tag = 'scratch operand']
  %s0 = inlined_call_operand.vmem [shape: f32[128,8], index: 0, kind: input, shape index: {}]
  %s1 = inlined_call_operand.vmem [shape: f32[128,128], index: 1, kind: input, shape index: {}]
  %s2 = inlined_call_operand.hbm [shape: f32[8,128], index: 2, kind: output, shape index: {}]
  %s3 = sld [smem:[#allocation0]]
  $region26: #{tpu_custom_call.1} parent=0
    _
  %s5 = ssub.s32 1, %s3
  %s6 = scalar_select 0, %s5, %s3
  $region1: #{tpu_custom_call.1} parent=0
    #allocation3 [shape = 'u8[4096]{0}', space=vmem, size = 0x1000, scoped, tag = 'output window, operand 0, single buffered']
    #allocation4 [shape = 's32[1]{0}', space=sflag, size = 0x4, scoped, tag = 'scoped memory for tpu_custom_call.1']
    %7 = vsyncpa [#allocation4], 0
    // Predicated region
    $region2: #{tpu_custom_call.1} parent=1 // pred_check
      _
    $region3: #{tpu_custom_call.1} parent=1 // pred_check_branch
      %9 = sbr.rel (0) target = $region5
    $region4: #{tpu_custom_call.1} parent=1 // pred_region
      _
    $region5: #{tpu_custom_call.1} parent=1 // pred_fallthru
      _
    // Predicated region
    $region6: #{tpu_custom_call.1} parent=1 // pred_check
      _
    $region7: #{tpu_custom_call.1} parent=1 // pred_check_branch
      %11 = sbr.rel (0) target = $region9
    $region8: #{tpu_custom_call.1} parent=1 // pred_region
      %s12 = sadd.s32 0, 0
      %s13 = smul.u32 16, %s12
      %p14 = scmp.lt.s32.totalorder %s13, 15
      %s15 = scalar_select %p14, %s13, 15
      %s16 = smul.addr %s15, 8
      %s17 = scalar_lea.vmem %s1, %s16
      %s18 = sadd.s32 0, 0
      %s19 = smul.u32 16, %s18
    $region9: #{tpu_custom_call.1} parent=1 // pred_fallthru
      _
    %s20 = sadd.s32 0, 0
    %s21 = smul.u32 16, %s20
    %p22 = scmp.lt.s32.totalorder %s21, 15
    %s23 = scalar_select %p22, %s21, 15
    %s24 = smul.addr %s23, 8
    %s25 = scalar_lea.vmem %s1, %s24
    %s26 = sadd.s32 0, 0
    %s27 = smul.u32 16, %s26
    %p28 = scmp.lt.s32.totalorder %s27, 15
    %s29 = scalar_select %p28, %s27, 15
    %s30 = smul.addr %s29, 8
    %s31 = scalar_lea.vmem %s1, %s30
    %s32 = sadd.s32 0, 0
    %s33 = smul.u32 16, %s32
    %p34 = scmp.eq.s32.totalorder 0, 0
    // Predicated region
    $region10: #{tpu_custom_call.1} parent=1 // pred_check
      %p35 = pneg %p34
    $region11: #{tpu_custom_call.1} parent=1 // pred_check_branch
      %37 = sbr.rel (%p35) target = $region13
    $region12: #{tpu_custom_call.1} parent=1 // pred_region
      %vm38 = vcmask 64512
      %39 = vst.msk [vmem:[#allocation2] sm:$0xff] %vm38, 0.0
      %40 = vst.msk [vmem:[#allocation2 + $0x8] sm:$0xff] %vm38, 0.0
      %41 = vst.msk [vmem:[#allocation2 + $0x10] sm:$0xff] %vm38, 0.0
      %42 = vst.msk [vmem:[#allocation2 + $0x18] sm:$0xff] %vm38, 0.0
      %43 = vst.msk [vmem:[#allocation2 + $0x20] sm:$0xff] %vm38, 0.0
      %44 = vst.msk [vmem:[#allocation2 + $0x28] sm:$0xff] %vm38, 0.0
      %45 = vst.msk [vmem:[#allocation2 + $0x30] sm:$0xff] %vm38, 0.0
      %46 = vst.msk [vmem:[#allocation2 + $0x38] sm:$0xff] %vm38, 0.0
      %47 = vst.msk [vmem:[#allocation2 + $0x40] sm:$0xff] %vm38, 0.0
      %48 = vst.msk [vmem:[#allocation2 + $0x48] sm:$0xff] %vm38, 0.0
      %49 = vst.msk [vmem:[#allocation2 + $0x50] sm:$0xff] %vm38, 0.0
      %50 = vst.msk [vmem:[#allocation2 + $0x58] sm:$0xff] %vm38, 0.0
      %51 = vst.msk [vmem:[#allocation2 + $0x60] sm:$0xff] %vm38, 0.0
      %52 = vst.msk [vmem:[#allocation2 + $0x68] sm:$0xff] %vm38, 0.0
      %53 = vst.msk [vmem:[#allocation2 + $0x70] sm:$0xff] %vm38, 0.0
      %54 = vst.msk [vmem:[#allocation2 + $0x78] sm:$0xff] %vm38, 0.0
    $region13: #{tpu_custom_call.1} parent=1 // pred_fallthru
      _
    %v55 = vld [vmem:[%s31] sm:$0xff]
    %v56 = vld [vmem:[%s31 + $0x8] sm:$0xff]
    %v57 = vld [vmem:[%s31 + $0x10] sm:$0xff]
    %v58 = vld [vmem:[%s31 + $0x18] sm:$0xff]
    %v59 = vld [vmem:[%s31 + $0x20] sm:$0xff]
    %v60 = vld [vmem:[%s31 + $0x28] sm:$0xff]
    %v61 = vld [vmem:[%s31 + $0x30] sm:$0xff]
    %v62 = vld [vmem:[%s31 + $0x38] sm:$0xff]
    %v63 = vld [vmem:[%s31 + $0x40] sm:$0xff]
    %v64 = vld [vmem:[%s31 + $0x48] sm:$0xff]
    %v65 = vld [vmem:[%s31 + $0x50] sm:$0xff]
    %v66 = vld [vmem:[%s31 + $0x58] sm:$0xff]
    %v67 = vld [vmem:[%s31 + $0x60] sm:$0xff]
    %v68 = vld [vmem:[%s31 + $0x68] sm:$0xff]
    %v69 = vld [vmem:[%s31 + $0x70] sm:$0xff]
    %v70 = vld [vmem:[%s31 + $0x78] sm:$0xff]
    %v71 = vld [vmem:[%s0] sm:$0xff]
    %v72 = vld [vmem:[%s0 + $0x8] sm:$0xff]
    %v73 = vld [vmem:[%s0 + $0x10] sm:$0xff]
    %v74 = vld [vmem:[%s0 + $0x18] sm:$0xff]
    %v75 = vld [vmem:[%s0 + $0x20] sm:$0xff]
    %v76 = vld [vmem:[%s0 + $0x28] sm:$0xff]
    %v77 = vld [vmem:[%s0 + $0x30] sm:$0xff]
    %v78 = vld [vmem:[%s0 + $0x38] sm:$0xff]
    %v79 = vld [vmem:[%s0 + $0x40] sm:$0xff]
    %v80 = vld [vmem:[%s0 + $0x48] sm:$0xff]
    %v81 = vld [vmem:[%s0 + $0x50] sm:$0xff]
    %v82 = vld [vmem:[%s0 + $0x58] sm:$0xff]
    %v83 = vld [vmem:[%s0 + $0x60] sm:$0xff]
    %v84 = vld [vmem:[%s0 + $0x68] sm:$0xff]
    %v85 = vld [vmem:[%s0 + $0x70] sm:$0xff]
    %v86 = vld [vmem:[%s0 + $0x78] sm:$0xff]
    %87 = vmatpush.msra.mxu0 %v86
    %88 = vmatpush.msra.mxu0 %v85
    %89 = vmatpush.msra.mxu0 %v84
    %90 = vmatpush.msra.mxu0 %v83
    %91 = vmatpush.msra.mxu0 %v82
    %92 = vmatpush.msra.mxu0 %v81
    %93 = vmatpush.msra.mxu0 %v80
    %94 = vmatpush.msra.mxu0 %v79
    %95 = vmatpush.msra.mxu0 %v78
    %96 = vmatpush.msra.mxu0 %v77
    %97 = vmatpush.msra.mxu0 %v76
    %98 = vmatpush.msra.mxu0 %v75
    %99 = vmatpush.msra.mxu0 %v74
    %100 = vmatpush.msra.mxu0 %v73
    %101 = vmatpush.msra.mxu0 %v72
    %102 = vmatpush.msra.mxu0 %v71
    %103 = vmatmul.f32.gmra.mxu0 %v55
    %v104 = vpop.f32.mrf.mxu0
    %v105 = vadd.f32 0.0, %v104
    %106 = vmatmul.f32.gmra.mxu0 %v56
    %v107 = vpop.f32.mrf.mxu0
    %v108 = vadd.f32 0.0, %v107
    %109 = vmatmul.f32.gmra.mxu0 %v57
    %v110 = vpop.f32.mrf.mxu0
    %v111 = vadd.f32 0.0, %v110
    %112 = vmatmul.f32.gmra.mxu0 %v58
    %v113 = vpop.f32.mrf.mxu0
    %v114 = vadd.f32 0.0, %v113
    %115 = vmatmul.f32.gmra.mxu0 %v59
    %v116 = vpop.f32.mrf.mxu0
    %v117 = vadd.f32 0.0, %v116
    %118 = vmatmul.f32.gmra.mxu0 %v60
    %v119 = vpop.f32.mrf.mxu0
    %v120 = vadd.f32 0.0, %v119
    %121 = vmatmul.f32.gmra.mxu0 %v61
    %v122 = vpop.f32.mrf.mxu0
    %v123 = vadd.f32 0.0, %v122
    %124 = vmatmul.f32.gmra.mxu0 %v62
    %v125 = vpop.f32.mrf.mxu0
    %v126 = vadd.f32 0.0, %v125
    %127 = vmatmul.f32.gmra.mxu0 %v63
    %v128 = vpop.f32.mrf.mxu0
    %v129 = vadd.f32 0.0, %v128
    %130 = vmatmul.f32.gmra.mxu0 %v64
    %v131 = vpop.f32.mrf.mxu0
    %v132 = vadd.f32 0.0, %v131
    %133 = vmatmul.f32.gmra.mxu0 %v65
    %v134 = vpop.f32.mrf.mxu0
    %v135 = vadd.f32 0.0, %v134
    %136 = vmatmul.f32.gmra.mxu0 %v66
    %v137 = vpop.f32.mrf.mxu0
    %v138 = vadd.f32 0.0, %v137
    %139 = vmatmul.f32.gmra.mxu0 %v67
    %v140 = vpop.f32.mrf.mxu0
    %v141 = vadd.f32 0.0, %v140
    %142 = vmatmul.f32.gmra.mxu0 %v68
    %v143 = vpop.f32.mrf.mxu0
    %v144 = vadd.f32 0.0, %v143
    %145 = vmatmul.f32.gmra.mxu0 %v69
    %v146 = vpop.f32.mrf.mxu0
    %v147 = vadd.f32 0.0, %v146
    %148 = vmatmul.f32.gmra.mxu0 %v70
    %v149 = vpop.f32.mrf.mxu0
    %v150 = vadd.f32 0.0, %v149
    %151 = vdwg.mxu0
    %s152 = sadd.s32 0, 0
    %s153 = smul.u32 %s152, 128
    %s154 = scalar_lea.vmem %s0, %s153
    %v155 = vld [vmem:[%s154] sm:$0xff]
    %v156 = vld [vmem:[%s154 + $0x8] sm:$0xff]
    %v157 = vld [vmem:[%s154 + $0x10] sm:$0xff]
    %v158 = vld [vmem:[%s154 + $0x18] sm:$0xff]
    %v159 = vld [vmem:[%s154 + $0x20] sm:$0xff]
    %v160 = vld [vmem:[%s154 + $0x28] sm:$0xff]
    %v161 = vld [vmem:[%s154 + $0x30] sm:$0xff]
    %v162 = vld [vmem:[%s154 + $0x38] sm:$0xff]
    %v163 = vld [vmem:[%s154 + $0x40] sm:$0xff]
    %v164 = vld [vmem:[%s154 + $0x48] sm:$0xff]
    %v165 = vld [vmem:[%s154 + $0x50] sm:$0xff]
    %v166 = vld [vmem:[%s154 + $0x58] sm:$0xff]
    %v167 = vld [vmem:[%s154 + $0x60] sm:$0xff]
    %v168 = vld [vmem:[%s154 + $0x68] sm:$0xff]
    %v169 = vld [vmem:[%s154 + $0x70] sm:$0xff]
    %v170 = vld [vmem:[%s154 + $0x78] sm:$0xff]
    %v171 = vld [vmem:[#allocation2] sm:$0xff]
    %v172 = vld [vmem:[#allocation2 + $0x8] sm:$0xff]
    %v173 = vld [vmem:[#allocation2 + $0x10] sm:$0xff]
    %v174 = vld [vmem:[#allocation2 + $0x18] sm:$0xff]
    %v175 = vld [vmem:[#allocation2 + $0x20] sm:$0xff]
    %v176 = vld [vmem:[#allocation2 + $0x28] sm:$0xff]
    %v177 = vld [vmem:[#allocation2 + $0x30] sm:$0xff]
    %v178 = vld [vmem:[#allocation2 + $0x38] sm:$0xff]
    %v179 = vld [vmem:[#allocation2 + $0x40] sm:$0xff]
    %v180 = vld [vmem:[#allocation2 + $0x48] sm:$0xff]
    %v181 = vld [vmem:[#allocation2 + $0x50] sm:$0xff]
    %v182 = vld [vmem:[#allocation2 + $0x58] sm:$0xff]
    %v183 = vld [vmem:[#allocation2 + $0x60] sm:$0xff]
    %v184 = vld [vmem:[#allocation2 + $0x68] sm:$0xff]
    %v185 = vld [vmem:[#allocation2 + $0x70] sm:$0xff]
    %v186 = vld [vmem:[#allocation2 + $0x78] sm:$0xff]
    %v187 = vmul.f32 %v105, %v155
    %v188 = vmul.f32 %v108, %v156
    %v189 = vmul.f32 %v111, %v157
    %v190 = vmul.f32 %v114, %v158
    %v191 = vmul.f32 %v117, %v159
    %v192 = vmul.f32 %v120, %v160
    %v193 = vmul.f32 %v123, %v161
    %v194 = vmul.f32 %v126, %v162
    %v195 = vmul.f32 %v129, %v163
    %v196 = vmul.f32 %v132, %v164
    %v197 = vmul.f32 %v135, %v165
    %v198 = vmul.f32 %v138, %v166
    %v199 = vmul.f32 %v141, %v167
    %v200 = vmul.f32 %v144, %v168
    %v201 = vmul.f32 %v147, %v169
    %v202 = vmul.f32 %v150, %v170
    %v203 = vadd.f32 %v171, %v187
    %v204 = vadd.f32 %v172, %v188
    %v205 = vadd.f32 %v173, %v189
    %v206 = vadd.f32 %v174, %v190
    %v207 = vadd.f32 %v175, %v191
    %v208 = vadd.f32 %v176, %v192
    %v209 = vadd.f32 %v177, %v193
    %v210 = vadd.f32 %v178, %v194
    %v211 = vadd.f32 %v179, %v195
    %v212 = vadd.f32 %v180, %v196
    %v213 = vadd.f32 %v181, %v197
    %v214 = vadd.f32 %v182, %v198
    %v215 = vadd.f32 %v183, %v199
    %v216 = vadd.f32 %v184, %v200
    %v217 = vadd.f32 %v185, %v201
    %v218 = vadd.f32 %v186, %v202
    %vm219 = vcmask 64512
    %220 = vst.msk [vmem:[#allocation2] sm:$0xff] %vm219, %v203
    %221 = vst.msk [vmem:[#allocation2 + $0x8] sm:$0xff] %vm219, %v204
    %222 = vst.msk [vmem:[#allocation2 + $0x10] sm:$0xff] %vm219, %v205
    %223 = vst.msk [vmem:[#allocation2 + $0x18] sm:$0xff] %vm219, %v206
    %224 = vst.msk [vmem:[#allocation2 + $0x20] sm:$0xff] %vm219, %v207
    %225 = vst.msk [vmem:[#allocation2 + $0x28] sm:$0xff] %vm219, %v208
    %226 = vst.msk [vmem:[#allocation2 + $0x30] sm:$0xff] %vm219, %v209
    %227 = vst.msk [vmem:[#allocation2 + $0x38] sm:$0xff] %vm219, %v210
    %228 = vst.msk [vmem:[#allocation2 + $0x40] sm:$0xff] %vm219, %v211
    %229 = vst.msk [vmem:[#allocation2 + $0x48] sm:$0xff] %vm219, %v212
    %230 = vst.msk [vmem:[#allocation2 + $0x50] sm:$0xff] %vm219, %v213
    %231 = vst.msk [vmem:[#allocation2 + $0x58] sm:$0xff] %vm219, %v214
    %232 = vst.msk [vmem:[#allocation2 + $0x60] sm:$0xff] %vm219, %v215
    %233 = vst.msk [vmem:[#allocation2 + $0x68] sm:$0xff] %vm219, %v216
    %234 = vst.msk [vmem:[#allocation2 + $0x70] sm:$0xff] %vm219, %v217
    %235 = vst.msk [vmem:[#allocation2 + $0x78] sm:$0xff] %vm219, %v218
    // Predicated region
    $region14: #{tpu_custom_call.1} parent=1 // pred_check
      %p236 = pneg %p34
    $region15: #{tpu_custom_call.1} parent=1 // pred_check_branch
      %238 = sbr.rel (%p236) target = $region17
    $region16: #{tpu_custom_call.1} parent=1 // pred_region
      %v239 = vld [vmem:[#allocation2] sm:$0xff]
      %v240 = vld [vmem:[#allocation2 + $0x8] sm:$0xff]
      %v241 = vld [vmem:[#allocation2 + $0x10] sm:$0xff]
      %v242 = vld [vmem:[#allocation2 + $0x18] sm:$0xff]
      %v243 = vld [vmem:[#allocation2 + $0x20] sm:$0xff]
      %v244 = vld [vmem:[#allocation2 + $0x28] sm:$0xff]
      %v245 = vld [vmem:[#allocation2 + $0x30] sm:$0xff]
      %v246 = vld [vmem:[#allocation2 + $0x38] sm:$0xff]
      %v247 = vld [vmem:[#allocation2 + $0x40] sm:$0xff]
      %v248 = vld [vmem:[#allocation2 + $0x48] sm:$0xff]
      %v249 = vld [vmem:[#allocation2 + $0x50] sm:$0xff]
      %v250 = vld [vmem:[#allocation2 + $0x58] sm:$0xff]
      %v251 = vld [vmem:[#allocation2 + $0x60] sm:$0xff]
      %v252 = vld [vmem:[#allocation2 + $0x68] sm:$0xff]
      %v253 = vld [vmem:[#allocation2 + $0x70] sm:$0xff]
      %v254 = vld [vmem:[#allocation2 + $0x78] sm:$0xff]
      %v255 = vsel %vm219, %v239, 0.0
      %v256 = vsel %vm219, %v240, 0.0
      %v257 = vadd.f32 %v255, %v256
      %v258 = vsel %vm219, %v241, 0.0
      %v259 = vadd.f32 %v257, %v258
      %v260 = vsel %vm219, %v242, 0.0
      %v261 = vadd.f32 %v259, %v260
      %v262 = vsel %vm219, %v243, 0.0
      %v263 = vadd.f32 %v261, %v262
      %v264 = vsel %vm219, %v244, 0.0
      %v265 = vadd.f32 %v263, %v264
      %v266 = vsel %vm219, %v245, 0.0
      %v267 = vadd.f32 %v265, %v266
      %v268 = vsel %vm219, %v246, 0.0
      %v269 = vadd.f32 %v267, %v268
      %v270 = vsel %vm219, %v247, 0.0
      %v271 = vadd.f32 %v269, %v270
      %v272 = vsel %vm219, %v248, 0.0
      %v273 = vadd.f32 %v271, %v272
      %v274 = vsel %vm219, %v249, 0.0
      %v275 = vadd.f32 %v273, %v274
      %v276 = vsel %vm219, %v250, 0.0
      %v277 = vadd.f32 %v275, %v276
      %v278 = vsel %vm219, %v251, 0.0
      %v279 = vadd.f32 %v277, %v278
      %v280 = vsel %vm219, %v252, 0.0
      %v281 = vadd.f32 %v279, %v280
      %v282 = vsel %vm219, %v253, 0.0
      %v283 = vadd.f32 %v281, %v282
      %v284 = vsel %vm219, %v254, 0.0
      %v285 = vadd.f32 %v283, %v284
      %286 = vadd.xlane.f32.xlu0 %v285
      %v287 = vpop.xlane.xlu0 %286
      %v288 = vrot.slane %v287, 4
      %v289 = vadd.f32 %v287, %v288
      %v290 = vrot.slane %v289, 2
      %v291 = vadd.f32 %v289, %v290
      %v292 = vrot.slane %v291, 1
      %v293 = vadd.f32 %v291, %v292
      %s294 = vtos %v293
      %v295 = vstv %s294
      %296 = vst [vmem:[#allocation3] sm:$0xff] %v295
    $region17: #{tpu_custom_call.1} parent=1 // pred_fallthru
      _
    // Predicated region
    $region18: #{tpu_custom_call.1} parent=1 // pred_check
      _
    $region19: #{tpu_custom_call.1} parent=1 // pred_check_branch
      %298 = sbr.rel (0) target = $region21
    $region20: #{tpu_custom_call.1} parent=1 // pred_region
      %300 = vsyncadd [#allocation4], 0
      %s302 = sshll.u32 [#allocation3], 4
      %s303 = int_to_ptr.vmem [resolvable:$true] %s302
      %s304 = sshll.u32 %s2, 4
      %s305 = int_to_ptr.hbm [resolvable:$true] %s304
      %307 = dma.vmem_to_hbm [thread:$0]  %s303, 128, %s305, [#allocation4]
    $region21: #{tpu_custom_call.1} parent=1 // pred_fallthru
      _
    // Predicated region
    $region22: #{tpu_custom_call.1} parent=1 // pred_check
      _
    $region23: #{tpu_custom_call.1} parent=1 // pred_check_branch
      %309 = sbr.rel (0) target = $region25
    $region24: #{tpu_custom_call.1} parent=1 // pred_region
      %311 = dma.done [#allocation4], 128
    $region25: #{tpu_custom_call.1} parent=1 // pred_fallthru
      _
    %312 = vsyncpa [#allocation4], 1

</llo_original>
